<compile_context>
chip_gen: v5e
topology: v5e:2x2
jax: 0.10.0
libtpu: 0.0.40
codegen_flags: <defaults>
</compile_context>

<pallas_src>
import jax
import jax.numpy as jnp
from jax import lax
from jax.experimental import pallas as pl
from jax.experimental.pallas import tpu as pltpu
import numpy as np

BN_EPS = 1e-5
LEAKY_SLOPE = 0.1

_VMEM_LIMIT = 32 * 1024 * 1024        # explicit scoped-VMEM limit (safe on v5e/v6e/v7x)
_TILE_VMEM_BUDGET = 6 * 1024 * 1024   # budget for double-buffered per-tile streams
_MAX_TILE_ROWS = 1024


def _round_up(x, m):
    return (x + m - 1) // m * m


def _pick_tile_rows(m_rows, bytes_per_row):
    """Largest M-tile that keeps ~2x double-buffered streams inside the VMEM budget."""
    tm = _TILE_VMEM_BUDGET // max(2 * bytes_per_row, 1)
    tm = int(min(tm, _MAX_TILE_ROWS, _round_up(m_rows, 8)))
    if tm >= 128:
        tm = (tm // 128) * 128          # 128-row multiples (MXU / sublane friendly)
    else:
        tm = max(8, (tm // 8) * 8)
    return tm


def _pad_rows(a, rows):
    return jnp.pad(a, ((0, rows - a.shape[0]), (0, 0))) if rows > a.shape[0] else a


_COMPILER_PARAMS = pltpu.CompilerParams(
    dimension_semantics=("parallel",),
    vmem_limit_bytes=_VMEM_LIMIT,
)


# ----------------------------- Pallas kernels ---------------------------------------

def _conv_matmul_tiled(patches, w_mat, bias, *, tile_rows, out_dtype):
    """out = patches @ w_mat + bias, tiled over pixel rows with a parallel 1-D grid."""
    Mp, K = patches.shape
    Cout = w_mat.shape[1]

    def kernel(p_ref, w_ref, b_ref, o_ref):
        acc = jnp.dot(p_ref[...], w_ref[...], preferred_element_type=jnp.float32)
        o_ref[...] = (acc + b_ref[...]).astype(o_ref.dtype)

    return pl.pallas_call(
        kernel,
        out_shape=jax.ShapeDtypeStruct((Mp, Cout), out_dtype),
        grid=(Mp // tile_rows,),
        in_specs=[
            pl.BlockSpec((tile_rows, K), lambda i: (i, 0)),
            pl.BlockSpec((K, Cout), lambda i: (0, 0)),   # whole weight resident (tiny)
            pl.BlockSpec((1, Cout), lambda i: (0, 0)),
        ],
        out_specs=pl.BlockSpec((tile_rows, Cout), lambda i: (i, 0)),
        compiler_params=_COMPILER_PARAMS,
    )(patches, w_mat, bias)


def _conv1_and_shortcut(patches, w1m, b1v, wsm, bsv, *, tile_rows, y_dtype):
    """Fused conv1 + shortcut conv: both matmuls share the same p1 patch tile in VMEM.

    Returns (y1, res) as two separate outputs so no post-hoc XLA slicing is needed.
    """
    Mp, K = patches.shape
    C1 = w1m.shape[1]
    Cs = wsm.shape[1]

    def kernel(p_ref, w1_ref, b1_ref, ws_ref, bs_ref, y_ref, r_ref):
        p = p_ref[...]                                      # load patch tile once
        y = jnp.dot(p, w1_ref[...], preferred_element_type=jnp.float32) + b1_ref[...]
        r = jnp.dot(p, ws_ref[...], preferred_element_type=jnp.float32) + bs_ref[...]
        y_ref[...] = y.astype(y_ref.dtype)
        r_ref[...] = r.astype(r_ref.dtype)

    return pl.pallas_call(
        kernel,
        out_shape=(jax.ShapeDtypeStruct((Mp, C1), y_dtype),
                   jax.ShapeDtypeStruct((Mp, Cs), jnp.float32)),
        grid=(Mp // tile_rows,),
        in_specs=[
            pl.BlockSpec((tile_rows, K), lambda i: (i, 0)),
            pl.BlockSpec((K, C1), lambda i: (0, 0)),
            pl.BlockSpec((1, C1), lambda i: (0, 0)),
            pl.BlockSpec((K, Cs), lambda i: (0, 0)),
            pl.BlockSpec((1, Cs), lambda i: (0, 0)),
        ],
        out_specs=(pl.BlockSpec((tile_rows, C1), lambda i: (i, 0)),
                   pl.BlockSpec((tile_rows, Cs), lambda i: (i, 0))),
        compiler_params=_COMPILER_PARAMS,
    )(patches, w1m, b1v, wsm, bsv)


def _conv_add_stats(patches, res, w_mat, bias, *, tile_rows, valid_rows, z_dtype):
    """z = patches @ w_mat + bias + res; also per-tile channel sum / sum-of-squares."""
    Mp, K = patches.shape
    Cout = w_mat.shape[1]
    n_tiles = Mp // tile_rows
    need_mask = valid_rows < Mp

    def kernel(p_ref, r_ref, w_ref, b_ref, z_ref, s_ref):
        acc = jnp.dot(p_ref[...], w_ref[...], preferred_element_type=jnp.float32)
        z = acc + b_ref[...] + r_ref[...]
        z_ref[...] = z.astype(z_ref.dtype)
        if need_mask:   # keep zero-padded rows out of the batch statistics
            row = tile_rows * pl.program_id(0) + lax.broadcasted_iota(
                jnp.int32, (tile_rows, Cout), 0)
            z = jnp.where(row < valid_rows, z, 0.0)
        s0 = jnp.sum(z, axis=0, keepdims=True)         # (1, C) channel sum
        s1 = jnp.sum(z * z, axis=0, keepdims=True)     # (1, C) channel sum of squares
        rows8 = lax.broadcasted_iota(jnp.int32, (8, Cout), 0)
        s_ref[...] = jnp.where(rows8 == 0, s0, jnp.where(rows8 == 1, s1, 0.0))

    z, stats = pl.pallas_call(
        kernel,
        out_shape=(jax.ShapeDtypeStruct((Mp, Cout), z_dtype),
                   jax.ShapeDtypeStruct((n_tiles * 8, Cout), jnp.float32)),
        grid=(n_tiles,),
        in_specs=[
            pl.BlockSpec((tile_rows, K), lambda i: (i, 0)),
            pl.BlockSpec((tile_rows, Cout), lambda i: (i, 0)),
            pl.BlockSpec((K, Cout), lambda i: (0, 0)),
            pl.BlockSpec((1, Cout), lambda i: (0, 0)),
        ],
        out_specs=(pl.BlockSpec((tile_rows, Cout), lambda i: (i, 0)),
                   pl.BlockSpec((8, Cout), lambda i: (i, 0))),
        compiler_params=_COMPILER_PARAMS,
    )(patches, res, w_mat, bias)
    return z, stats


def _bn_act(z, scale, shift, *, tile_rows):
    """out = LeakyReLU(z * scale + shift), tiled over pixel rows (parallel)."""
    Mp, C = z.shape

    def kernel(z_ref, sc_ref, sh_ref, o_ref):
        t = z_ref[...].astype(jnp.float32) * sc_ref[...] + sh_ref[...]
        o_ref[...] = jnp.where(t >= 0, t, LEAKY_SLOPE * t).astype(o_ref.dtype)

    return pl.pallas_call(
        kernel,
        out_shape=jax.ShapeDtypeStruct((Mp, C), jnp.float32),
        grid=(Mp // tile_rows,),
        in_specs=[
            pl.BlockSpec((tile_rows, C), lambda i: (i, 0)),
            pl.BlockSpec((1, C), lambda i: (0, 0)),
            pl.BlockSpec((1, C), lambda i: (0, 0)),
        ],
        out_specs=pl.BlockSpec((tile_rows, C), lambda i: (i, 0)),
        compiler_params=_COMPILER_PARAMS,
    )(z, scale, shift)


# ----------------------------- JAX glue ----------------------------------------------

def _im2col(x_nhwc, stride):
    """3x3 / pad=1 patch extraction.  Returns ((N*Ho*Wo, 9*C), (N, Ho, Wo))."""
    N, H, W, C = x_nhwc.shape
    xp = jnp.pad(x_nhwc, ((0, 0), (1, 1), (1, 1), (0, 0)))
    Ho = (H - 1) // stride + 1
    Wo = (W - 1) // stride + 1
    cols = []
    for dy in range(3):
        for dx in range(3):
            cols.append(xp[:, dy:dy + stride * (Ho - 1) + 1:stride,
                              dx:dx + stride * (Wo - 1) + 1:stride, :])
    patches = jnp.concatenate(cols, axis=-1)            # (N, Ho, Wo, 9*C)
    return patches.reshape(N * Ho * Wo, 9 * C), (N, Ho, Wo)


def residual_cnn_forward(x_nchw, params, stride, *, mxu_dtype=jnp.bfloat16):
    """Pallas implementation of ResidualCNN.forward (module in training mode).

    x_nchw: (N, Cin, H, W) f32.  Returns (N, Cout, Ho, Wo) f32.
    mxu_dtype: matmul-operand / intermediate-storage dtype (bf16 halves patch & z HBM
               traffic and doubles MXU rate, f32 accumulation).  Pass jnp.float32 for
               bit-tight numerics.
    """
    w1, b1, w2, b2, ws, bs, gamma, beta = params
    Cin = w1.shape[2]
    Cout = w2.shape[3]
    is_shortcut = (Cin != Cout) or (stride != 1)
    z_dtype = jnp.float32 if mxu_dtype == jnp.float32 else jnp.bfloat16

    x = jnp.transpose(x_nchw, (0, 2, 3, 1)).astype(jnp.float32)     # NHWC

    # ---- conv1 (+ fused shortcut conv sharing the same p1 patches) ------------------
    p1, (N, Ho, Wo) = _im2col(x.astype(mxu_dtype), stride)
    M = N * Ho * Wo
    K1 = p1.shape[1]                                                 # 9 * Cin

    msz = jnp.dtype(mxu_dtype).itemsize
    zsz = jnp.dtype(z_dtype).itemsize
    bytes_per_row = K1 * msz + Cin * msz + Cout * (4 + zsz) + 8      # max stream set
    TM = _pick_tile_rows(M, bytes_per_row)
    Mp = _round_up(M, TM)
    p1 = _pad_rows(p1, Mp)

    if is_shortcut:
        y1, res = _conv1_and_shortcut(
            p1,
            w1.reshape(9 * Cin, Cin).astype(mxu_dtype),
            b1.reshape(1, Cin).astype(jnp.float32),
            ws.reshape(9 * Cin, Cout).astype(mxu_dtype),
            bs.reshape(1, Cout).astype(jnp.float32),
            tile_rows=TM, y_dtype=mxu_dtype)
    else:
        y1 = _conv_matmul_tiled(
            p1,
            w1.reshape(9 * Cin, Cin).astype(mxu_dtype),
            b1.reshape(1, Cin).astype(jnp.float32),
            tile_rows=TM, out_dtype=mxu_dtype)
        res = _pad_rows(x.reshape(M, Cin), Mp)                       # identity residual

    # ---- conv2 + residual add + BN statistics (fused, tiled, two-pass BN) -----------
    p2, _ = _im2col(y1[:M].reshape(N, Ho, Wo, Cin), 1)               # already mxu_dtype
    p2 = _pad_rows(p2, Mp)
    z, stats = _conv_add_stats(
        p2, res,
        w2.reshape(9 * Cin, Cout).astype(mxu_dtype),
        b2.reshape(1, Cout).astype(jnp.float32),
        tile_rows=TM, valid_rows=M, z_dtype=z_dtype)

    # ---- finalize BN (global batch statistics) + affine + LeakyReLU -----------------
    stats = stats.reshape(Mp // TM, 8, Cout)
    total = jnp.sum(stats[:, 0, :], axis=0)
    total_sq = jnp.sum(stats[:, 1, :], axis=0)
    mean = total / M
    var = jnp.maximum(total_sq / M - mean * mean, 0.0)               # biased var (train)
    inv = lax.rsqrt(var + BN_EPS)
    scale = (gamma * inv).reshape(1, Cout).astype(jnp.float32)
    shift = (beta - mean * gamma * inv).reshape(1, Cout).astype(jnp.float32)

    out = _bn_act(z, scale, shift, tile_rows=TM)[:M]
    out = out.reshape(N, Ho, Wo, Cout)
    return jnp.transpose(out, (0, 3, 1, 2))                          # back to NCHW


# ----------------------------- pure-JAX reference ------------------------------------

def _reference(x_nchw, params, stride):
    w1, b1, w2, b2, ws, bs, gamma, beta = params
    Cin = w1.shape[2]
    Cout = w2.shape[3]
    is_shortcut = (Cin != Cout) or (stride != 1)
    x = jnp.transpose(x_nchw, (0, 2, 3, 1))
    dn = ('NHWC', 'HWIO', 'NHWC')

    def conv(v, w, b, s):
        return lax.conv_general_dilated(v, w, (s, s), [(1, 1), (1, 1)],
                                        dimension_numbers=dn,
                                        precision=lax.Precision.HIGHEST) + b

    res = conv(x, ws, bs, stride) if is_shortcut else x
    y = conv(x, w1, b1, stride)
    y = conv(y, w2, b2, 1)
    z = y + res
    mean = jnp.mean(z, axis=(0, 1, 2), keepdims=True)
    var = jnp.mean((z - mean) ** 2, axis=(0, 1, 2), keepdims=True)
    out = (z - mean) * lax.rsqrt(var + BN_EPS) * gamma + beta
    out = jnp.where(out >= 0, out, LEAKY_SLOPE * out)
    return jnp.transpose(out, (0, 3, 1, 2))


# ----------------------------- main ---------------------------------------------------

if __name__ == "__main__":
    def make_params(key, Cin, Cout):
        ks = jax.random.split(key, 8)
        w1 = 0.1 * jax.random.normal(ks[0], (3, 3, Cin, Cin), jnp.float32)
        b1 = 0.1 * jax.random.normal(ks[1], (Cin,), jnp.float32)
        w2 = 0.1 * jax.random.normal(ks[2], (3, 3, Cin, Cout), jnp.float32)
        b2 = 0.1 * jax.random.normal(ks[3], (Cout,), jnp.float32)
        ws = 0.1 * jax.random.normal(ks[4], (3, 3, Cin, Cout), jnp.float32)
        bs = 0.1 * jax.random.normal(ks[5], (Cout,), jnp.float32)
        gamma = 1.0 + 0.1 * jax.random.normal(ks[6], (Cout,), jnp.float32)
        beta = 0.1 * jax.random.normal(ks[7], (Cout,), jnp.float32)
        return (w1, b1, w2, b2, ws, bs, gamma, beta)

    key = jax.random.PRNGKey(0)
    k_p1, k_x1, k_p2, k_x2 = jax.random.split(key, 4)

    # Case 1: conv shortcut (Cin != Cout, stride 2) -------------------------------------
    N, Cin, Cout, H, W, stride = 2, 4, 8, 16, 16, 2
    params = make_params(k_p1, Cin, Cout)
    x = jax.random.normal(k_x1, (N, Cin, H, W), jnp.float32)        # NCHW like PyTorch
    ref = jax.block_until_ready(_reference(x, params, stride))

    out_f32 = jax.block_until_ready(
        residual_cnn_forward(x, params, stride, mxu_dtype=jnp.float32))
    np.testing.assert_allclose(np.asarray(out_f32), np.asarray(ref),
                               rtol=1e-4, atol=1e-4)

    out_bf16 = jax.block_until_ready(
        residual_cnn_forward(x, params, stride, mxu_dtype=jnp.bfloat16))
    np.testing.assert_allclose(np.asarray(out_bf16), np.asarray(ref),
                               rtol=5e-2, atol=5e-2)

    # Case 2: identity shortcut (Cin == Cout, stride 1) ---------------------------------
    N2, C2, H2, W2 = 2, 8, 16, 16
    params2 = make_params(k_p2, C2, C2)
    x2 = jax.random.normal(k_x2, (N2, C2, H2, W2), jnp.float32)
    ref2 = jax.block_until_ready(_reference(x2, params2, 1))
    out2 = jax.block_until_ready(
        residual_cnn_forward(x2, params2, 1, mxu_dtype=jnp.float32))
    np.testing.assert_allclose(np.asarray(out2), np.asarray(ref2),
                               rtol=1e-4, atol=1e-4)

    print("KERNEL_OK")
</pallas_src>

<mosaic_0001>
module attributes {stable_mosaic.version = 11 : i64} {
  func.func @kernel(%arg0: i32, %arg1: memref<128x36xf32, #tpu.memory_space<vmem>>, %arg2: memref<36x4xf32, #tpu.memory_space<vmem>>, %arg3: memref<1x4xf32, #tpu.memory_space<vmem>>, %arg4: memref<36x8xf32, #tpu.memory_space<vmem>>, %arg5: memref<1x8xf32, #tpu.memory_space<vmem>>, %arg6: memref<128x4xf32, #tpu.memory_space<vmem>>, %arg7: memref<128x8xf32, #tpu.memory_space<vmem>>) attributes {dimension_semantics = [#tpu.dimension_semantics<parallel>], iteration_bounds = array<i64: 1>, scalar_prefetch = 0 : i64, scratch_operands = 0 : i64, tpu.core_type = #tpu.core_type<tc>, window_params = [{transform_indices = @transform_0, window_bounds = array<i64: 128, 36>}, {pipeline_mode = #tpu.pipeline_mode<synchronous>, transform_indices = @transform_1, window_bounds = array<i64: 36, 4>}, {pipeline_mode = #tpu.pipeline_mode<synchronous>, transform_indices = @transform_2, window_bounds = array<i64: 1, 4>}, {pipeline_mode = #tpu.pipeline_mode<synchronous>, transform_indices = @transform_3, window_bounds = array<i64: 36, 8>}, {pipeline_mode = #tpu.pipeline_mode<synchronous>, transform_indices = @transform_4, window_bounds = array<i64: 1, 8>}, {transform_indices = @transform_5, window_bounds = array<i64: 128, 4>}, {transform_indices = @transform_6, window_bounds = array<i64: 128, 8>}]} {
    %c0 = arith.constant 0 : index
    %c0_0 = arith.constant 0 : index
    %0 = vector.load %arg1[%c0, %c0_0] : memref<128x36xf32, #tpu.memory_space<vmem>>, vector<128x36xf32>
    %c0_1 = arith.constant 0 : index
    %c0_2 = arith.constant 0 : index
    %1 = vector.load %arg2[%c0_1, %c0_2] : memref<36x4xf32, #tpu.memory_space<vmem>>, vector<36x4xf32>
    %cst = arith.constant dense<0.000000e+00> : vector<128x4xf32>
    %2 = tpu.matmul %0, %1, %cst {dimension_numbers = #tpu.dot_dimension_numbers<[1], [0], [0], [1], [0, 0, 1, 1], [], []>} : vector<128x36xf32>, vector<36x4xf32>, vector<128x4xf32> -> vector<128x4xf32>
    %c0_3 = arith.constant 0 : index
    %c0_4 = arith.constant 0 : index
    %3 = vector.load %arg3[%c0_3, %c0_4] : memref<1x4xf32, #tpu.memory_space<vmem>>, vector<1x4xf32>
    %4 = vector.broadcast %3 : vector<1x4xf32> to vector<128x4xf32>
    %5 = arith.addf %2, %4 : vector<128x4xf32>
    %c0_5 = arith.constant 0 : index
    %c0_6 = arith.constant 0 : index
    %6 = vector.load %arg4[%c0_5, %c0_6] : memref<36x8xf32, #tpu.memory_space<vmem>>, vector<36x8xf32>
    %cst_7 = arith.constant dense<0.000000e+00> : vector<128x8xf32>
    %7 = tpu.matmul %0, %6, %cst_7 {dimension_numbers = #tpu.dot_dimension_numbers<[1], [0], [0], [1], [0, 0, 1, 1], [], []>} : vector<128x36xf32>, vector<36x8xf32>, vector<128x8xf32> -> vector<128x8xf32>
    %c0_8 = arith.constant 0 : index
    %c0_9 = arith.constant 0 : index
    %8 = vector.load %arg5[%c0_8, %c0_9] : memref<1x8xf32, #tpu.memory_space<vmem>>, vector<1x8xf32>
    %9 = vector.broadcast %8 : vector<1x8xf32> to vector<128x8xf32>
    %10 = arith.addf %7, %9 : vector<128x8xf32>
    %c0_10 = arith.constant 0 : index
    %c0_11 = arith.constant 0 : index
    %11 = vector.load %arg6[%c0_10, %c0_11] : memref<128x4xf32, #tpu.memory_space<vmem>>, vector<128x4xf32>
    tpu.vector_store %arg6[%c0_10, %c0_11], %5 {strides = array<i32>} : memref<128x4xf32, #tpu.memory_space<vmem>>, vector<128x4xf32>,
    %c0_12 = arith.constant 0 : index
    %c0_13 = arith.constant 0 : index
    %12 = vector.load %arg7[%c0_12, %c0_13] : memref<128x8xf32, #tpu.memory_space<vmem>>, vector<128x8xf32>
    tpu.vector_store %arg7[%c0_12, %c0_13], %10 {strides = array<i32>} : memref<128x8xf32, #tpu.memory_space<vmem>>, vector<128x8xf32>,
    return
  }
  func.func @transform_0(%arg0: i32) -> (i32, i32) {
    %c0_i32 = arith.constant 0 : i32
    %c0_i32_0 = arith.constant 0 : i32
    return %arg0, %c0_i32 : i32, i32
  }
  func.func @transform_1(%arg0: i32) -> (i32, i32) {
    %c0_i32 = arith.constant 0 : i32
    %c0_i32_0 = arith.constant 0 : i32
    %c0_i32_1 = arith.constant 0 : i32
    return %c0_i32, %c0_i32_0 : i32, i32
  }
  func.func @transform_2(%arg0: i32) -> (i32, i32) {
    %c0_i32 = arith.constant 0 : i32
    %c0_i32_0 = arith.constant 0 : i32
    %c0_i32_1 = arith.constant 0 : i32
    return %c0_i32, %c0_i32_0 : i32, i32
  }
  func.func @transform_3(%arg0: i32) -> (i32, i32) {
    %c0_i32 = arith.constant 0 : i32
    %c0_i32_0 = arith.constant 0 : i32
    %c0_i32_1 = arith.constant 0 : i32
    return %c0_i32, %c0_i32_0 : i32, i32
  }
  func.func @transform_4(%arg0: i32) -> (i32, i32) {
    %c0_i32 = arith.constant 0 : i32
    %c0_i32_0 = arith.constant 0 : i32
    %c0_i32_1 = arith.constant 0 : i32
    return %c0_i32, %c0_i32_0 : i32, i32
  }
  func.func @transform_5(%arg0: i32) -> (i32, i32) {
    %c0_i32 = arith.constant 0 : i32
    %c0_i32_0 = arith.constant 0 : i32
    return %arg0, %c0_i32 : i32, i32
  }
  func.func @transform_6(%arg0: i32) -> (i32, i32) {
    %c0_i32 = arith.constant 0 : i32
    %c0_i32_0 = arith.constant 0 : i32
    return %arg0, %c0_i32 : i32, i32
  }
}

</mosaic_0001>

<llo_original>
// kernel: tpu_custom_call.1
$region0: #{tpu_custom_call.1}
  #allocation0 [shape = 'u32[]', space=smem, size = 0x4, offset = 0x4, fixed_abs, tag = 'smem constant byte address 0x4 - core index']
  #allocation1 [shape = 'u32[72,128]{1,0:T(1,128)}', space=vmem, size = 0x9000, scoped, tag = 'internal scratch']
  %s0 = inlined_call_operand.vmem [shape: f32[128,36], index: 0, kind: input, shape index: {}]
  %s1 = inlined_call_operand.vmem [shape: f32[36,4], index: 1, kind: input, shape index: {}]
  %s2 = inlined_call_operand.vmem [shape: f32[1,4], index: 2, kind: input, shape index: {}]
  %s3 = inlined_call_operand.vmem [shape: f32[36,8], index: 3, kind: input, shape index: {}]
  %s4 = inlined_call_operand.vmem [shape: f32[1,8], index: 4, kind: input, shape index: {}]
  %s5 = inlined_call_operand.vmem [shape: f32[128,4], index: 5, kind: output, shape index: {0}]
  %s6 = inlined_call_operand.vmem [shape: f32[128,8], index: 6, kind: output, shape index: {1}]
  %7 = xla_tuple %s5, %s6
  %s8 = sld [smem:[#allocation0]]
  $region38: #{tpu_custom_call.1} parent=0
    _
  %s10 = ssub.s32 1, %s8
  %s11 = scalar_select 0, %s10, %s8
  // Predicated region
  $region2: #{tpu_custom_call.1} parent=0 // pred_check
    _
  $region3: #{tpu_custom_call.1} parent=0 // pred_check_branch
    %13 = sbr.rel (0) target = $region5
  $region4: #{tpu_custom_call.1} parent=0 // pred_region
    _
  $region5: #{tpu_custom_call.1} parent=0 // pred_fallthru
    _
  // Predicated region
  $region6: #{tpu_custom_call.1} parent=0 // pred_check
    _
  $region7: #{tpu_custom_call.1} parent=0 // pred_check_branch
    %15 = sbr.rel (0) target = $region9
  $region8: #{tpu_custom_call.1} parent=0 // pred_region
    _
  $region9: #{tpu_custom_call.1} parent=0 // pred_fallthru
    _
  // Predicated region
  $region10: #{tpu_custom_call.1} parent=0 // pred_check
    _
  $region11: #{tpu_custom_call.1} parent=0 // pred_check_branch
    %17 = sbr.rel (0) target = $region13
  $region12: #{tpu_custom_call.1} parent=0 // pred_region
    _
  $region13: #{tpu_custom_call.1} parent=0 // pred_fallthru
    _
  // Predicated region
  $region14: #{tpu_custom_call.1} parent=0 // pred_check
    _
  $region15: #{tpu_custom_call.1} parent=0 // pred_check_branch
    %19 = sbr.rel (0) target = $region17
  $region16: #{tpu_custom_call.1} parent=0 // pred_region
    _
  $region17: #{tpu_custom_call.1} parent=0 // pred_fallthru
    _
  // Predicated region
  $region18: #{tpu_custom_call.1} parent=0 // pred_check
    _
  $region19: #{tpu_custom_call.1} parent=0 // pred_check_branch
    %21 = sbr.rel (0) target = $region21
  $region20: #{tpu_custom_call.1} parent=0 // pred_region
    _
  $region21: #{tpu_custom_call.1} parent=0 // pred_fallthru
    _
  %v22 = vld [vmem:[%s0] sm:$0xff]
  %v23 = vld [vmem:[%s0 + $0x8] sm:$0xff]
  %v24 = vld [vmem:[%s0 + $0x10] sm:$0xff]
  %v25 = vld [vmem:[%s0 + $0x18] sm:$0xff]
  %v26 = vld [vmem:[%s0 + $0x20] sm:$0xff]
  %v27 = vld [vmem:[%s0 + $0x28] sm:$0xff]
  %v28 = vld [vmem:[%s0 + $0x30] sm:$0xff]
  %v29 = vld [vmem:[%s0 + $0x38] sm:$0xff]
  %v30 = vld [vmem:[%s0 + $0x40] sm:$0xff]
  %v31 = vld [vmem:[%s0 + $0x48] sm:$0xff]
  %v32 = vld [vmem:[%s0 + $0x50] sm:$0xff]
  %v33 = vld [vmem:[%s0 + $0x58] sm:$0xff]
  %v34 = vld [vmem:[%s0 + $0x60] sm:$0xff]
  %v35 = vld [vmem:[%s0 + $0x68] sm:$0xff]
  %v36 = vld [vmem:[%s0 + $0x70] sm:$0xff]
  %v37 = vld [vmem:[%s0 + $0x78] sm:$0xff]
  %v38 = vld [vmem:[%s1] sm:$0xff]
  %v39 = vld [vmem:[%s1 + $0x8] sm:$0xff]
  %v40 = vld [vmem:[%s1 + $0x10] sm:$0xff]
  %v41 = vld [vmem:[%s1 + $0x18] sm:$0xff]
  %v42 = vld [vmem:[%s1 + $0x20] sm:$0xf]
  %v43 = vld [vmem:[%s2] sm:$0x1]
  %v45 = vperm.slane %v43, 0
  %vm47 = vcmask 293888
  %v49 = vsel %vm47, %v22, 0
  %v52 = vsel %vm47, %v23, 0
  %v55 = vsel %vm47, %v24, 0
  %v58 = vsel %vm47, %v25, 0
  %v61 = vsel %vm47, %v26, 0
  %v64 = vsel %vm47, %v27, 0
  %v67 = vsel %vm47, %v28, 0
  %v70 = vsel %vm47, %v29, 0
  %v73 = vsel %vm47, %v30, 0
  %v76 = vsel %vm47, %v31, 0
  %v79 = vsel %vm47, %v32, 0
  %v82 = vsel %vm47, %v33, 0
  %v85 = vsel %vm47, %v34, 0
  %v88 = vsel %vm47, %v35, 0
  %v91 = vsel %vm47, %v36, 0
  %v94 = vsel %vm47, %v37, 0
  %vm96 = vcmask 1043456
  %v98 = vsel %vm96, %v42, 0
  %100 = vmatpush.msra.mxu0 0.0
  %101 = vmatpush.msra.mxu0 0.0
  %102 = vmatpush.msra.mxu0 0.0
  %103 = vmatpush.msra.mxu0 0.0
  %104 = vmatpush.msra.mxu0 0.0
  %105 = vmatpush.msra.mxu0 0.0
  %106 = vmatpush.msra.mxu0 0.0
  %107 = vmatpush.msra.mxu0 0.0
  %108 = vmatpush.msra.mxu0 0.0
  %109 = vmatpush.msra.mxu0 0.0
  %110 = vmatpush.msra.mxu0 0.0
  %111 = vmatpush.msra.mxu0 %v98
  %112 = vmatpush.msra.mxu0 %v41
  %113 = vmatpush.msra.mxu0 %v40
  %114 = vmatpush.msra.mxu0 %v39
  %115 = vmatpush.msra.mxu0 %v38
  %116 = vmatmul.f32.gmra.mxu0 %v49
  %v117 = vpop.f32.mrf.mxu0
  %v118 = vadd.f32 %v45, %v117
  %119 = vmatmul.f32.gmra.mxu0 %v52
  %v120 = vpop.f32.mrf.mxu0
  %v121 = vadd.f32 %v45, %v120
  %122 = vmatmul.f32.gmra.mxu0 %v55
  %v123 = vpop.f32.mrf.mxu0
  %v124 = vadd.f32 %v45, %v123
  %125 = vmatmul.f32.gmra.mxu0 %v58
  %v126 = vpop.f32.mrf.mxu0
  %v127 = vadd.f32 %v45, %v126
  %128 = vmatmul.f32.gmra.mxu0 %v61
  %v129 = vpop.f32.mrf.mxu0
  %v130 = vadd.f32 %v45, %v129
  %131 = vmatmul.f32.gmra.mxu0 %v64
  %v132 = vpop.f32.mrf.mxu0
  %v133 = vadd.f32 %v45, %v132
  %134 = vmatmul.f32.gmra.mxu0 %v67
  %v135 = vpop.f32.mrf.mxu0
  %v136 = vadd.f32 %v45, %v135
  %137 = vmatmul.f32.gmra.mxu0 %v70
  %v138 = vpop.f32.mrf.mxu0
  %v139 = vadd.f32 %v45, %v138
  %140 = vmatmul.f32.gmra.mxu0 %v73
  %v141 = vpop.f32.mrf.mxu0
  %v142 = vadd.f32 %v45, %v141
  %143 = vmatmul.f32.gmra.mxu0 %v76
  %v144 = vpop.f32.mrf.mxu0
  %v145 = vadd.f32 %v45, %v144
  %146 = vmatmul.f32.gmra.mxu0 %v79
  %v147 = vpop.f32.mrf.mxu0
  %v148 = vadd.f32 %v45, %v147
  %149 = vmatmul.f32.gmra.mxu0 %v82
  %v150 = vpop.f32.mrf.mxu0
  %v151 = vadd.f32 %v45, %v150
  %152 = vmatmul.f32.gmra.mxu0 %v85
  %v153 = vpop.f32.mrf.mxu0
  %v154 = vadd.f32 %v45, %v153
  %155 = vmatmul.f32.gmra.mxu0 %v88
  %v156 = vpop.f32.mrf.mxu0
  %v157 = vadd.f32 %v45, %v156
  %158 = vmatmul.f32.gmra.mxu0 %v91
  %v159 = vpop.f32.mrf.mxu0
  %v160 = vadd.f32 %v45, %v159
  %161 = vmatmul.f32.gmra.mxu0 %v94
  %v162 = vpop.f32.mrf.mxu0
  %v163 = vadd.f32 %v45, %v162
  %164 = vdwg.mxu0
  %v165 = vld [vmem:[%s3] sm:$0xff]
  %v166 = vld [vmem:[%s3 + $0x8] sm:$0xff]
  %v167 = vld [vmem:[%s3 + $0x10] sm:$0xff]
  %v168 = vld [vmem:[%s3 + $0x18] sm:$0xff]
  %v169 = vld [vmem:[%s3 + $0x20] sm:$0xf]
  %v170 = vld [vmem:[%s4] sm:$0x1]
  %v172 = vperm.slane %v170, 0
  %v175 = vsel %vm96, %v169, 0
  %177 = vmatpush.msra.mxu0 0.0
  %178 = vmatpush.msra.mxu0 0.0
  %179 = vmatpush.msra.mxu0 0.0
  %180 = vmatpush.msra.mxu0 0.0
  %181 = vmatpush.msra.mxu0 0.0
  %182 = vmatpush.msra.mxu0 0.0
  %183 = vmatpush.msra.mxu0 0.0
  %184 = vmatpush.msra.mxu0 0.0
  %185 = vmatpush.msra.mxu0 0.0
  %186 = vmatpush.msra.mxu0 0.0
  %187 = vmatpush.msra.mxu0 0.0
  %188 = vmatpush.msra.mxu0 %v175
  %189 = vmatpush.msra.mxu0 %v168
  %190 = vmatpush.msra.mxu0 %v167
  %191 = vmatpush.msra.mxu0 %v166
  %192 = vmatpush.msra.mxu0 %v165
  %193 = vmatmul.f32.gmra.mxu0 %v49
  %v194 = vpop.f32.mrf.mxu0
  %v195 = vadd.f32 %v172, %v194
  %196 = vmatmul.f32.gmra.mxu0 %v52
  %v197 = vpop.f32.mrf.mxu0
  %v198 = vadd.f32 %v172, %v197
  %199 = vmatmul.f32.gmra.mxu0 %v55
  %v200 = vpop.f32.mrf.mxu0
  %v201 = vadd.f32 %v172, %v200
  %202 = vmatmul.f32.gmra.mxu0 %v58
  %v203 = vpop.f32.mrf.mxu0
  %v204 = vadd.f32 %v172, %v203
  %205 = vmatmul.f32.gmra.mxu0 %v61
  %v206 = vpop.f32.mrf.mxu0
  %v207 = vadd.f32 %v172, %v206
  %208 = vmatmul.f32.gmra.mxu0 %v64
  %v209 = vpop.f32.mrf.mxu0
  %v210 = vadd.f32 %v172, %v209
  %211 = vmatmul.f32.gmra.mxu0 %v67
  %v212 = vpop.f32.mrf.mxu0
  %v213 = vadd.f32 %v172, %v212
  %214 = vmatmul.f32.gmra.mxu0 %v70
  %v215 = vpop.f32.mrf.mxu0
  %v216 = vadd.f32 %v172, %v215
  %217 = vmatmul.f32.gmra.mxu0 %v73
  %v218 = vpop.f32.mrf.mxu0
  %v219 = vadd.f32 %v172, %v218
  %220 = vmatmul.f32.gmra.mxu0 %v76
  %v221 = vpop.f32.mrf.mxu0
  %v222 = vadd.f32 %v172, %v221
  %223 = vmatmul.f32.gmra.mxu0 %v79
  %v224 = vpop.f32.mrf.mxu0
  %v225 = vadd.f32 %v172, %v224
  %226 = vmatmul.f32.gmra.mxu0 %v82
  %v227 = vpop.f32.mrf.mxu0
  %v228 = vadd.f32 %v172, %v227
  %229 = vmatmul.f32.gmra.mxu0 %v85
  %v230 = vpop.f32.mrf.mxu0
  %v231 = vadd.f32 %v172, %v230
  %232 = vmatmul.f32.gmra.mxu0 %v88
  %v233 = vpop.f32.mrf.mxu0
  %v234 = vadd.f32 %v172, %v233
  %235 = vmatmul.f32.gmra.mxu0 %v91
  %v236 = vpop.f32.mrf.mxu0
  %v237 = vadd.f32 %v172, %v236
  %238 = vmatmul.f32.gmra.mxu0 %v94
  %v239 = vpop.f32.mrf.mxu0
  %v240 = vadd.f32 %v172, %v239
  %241 = vdwg.mxu0
  %vm242 = vcmask 31744
  %243 = vst.msk [vmem:[%s5] sm:$0xff] %vm242, %v118
  %244 = vst.msk [vmem:[%s5 + $0x8] sm:$0xff] %vm242, %v121
  %245 = vst.msk [vmem:[%s5 + $0x10] sm:$0xff] %vm242, %v124
  %246 = vst.msk [vmem:[%s5 + $0x18] sm:$0xff] %vm242, %v127
  %247 = vst.msk [vmem:[%s5 + $0x20] sm:$0xff] %vm242, %v130
  %248 = vst.msk [vmem:[%s5 + $0x28] sm:$0xff] %vm242, %v133
  %249 = vst.msk [vmem:[%s5 + $0x30] sm:$0xff] %vm242, %v136
  %250 = vst.msk [vmem:[%s5 + $0x38] sm:$0xff] %vm242, %v139
  %251 = vst.msk [vmem:[%s5 + $0x40] sm:$0xff] %vm242, %v142
  %252 = vst.msk [vmem:[%s5 + $0x48] sm:$0xff] %vm242, %v145
  %253 = vst.msk [vmem:[%s5 + $0x50] sm:$0xff] %vm242, %v148
  %254 = vst.msk [vmem:[%s5 + $0x58] sm:$0xff] %vm242, %v151
  %255 = vst.msk [vmem:[%s5 + $0x60] sm:$0xff] %vm242, %v154
  %256 = vst.msk [vmem:[%s5 + $0x68] sm:$0xff] %vm242, %v157
  %257 = vst.msk [vmem:[%s5 + $0x70] sm:$0xff] %vm242, %v160
  %258 = vst.msk [vmem:[%s5 + $0x78] sm:$0xff] %vm242, %v163
  %vm259 = vcmask 64512
  %260 = vst.msk [vmem:[%s6] sm:$0xff] %vm259, %v195
  %261 = vst.msk [vmem:[%s6 + $0x8] sm:$0xff] %vm259, %v198
  %262 = vst.msk [vmem:[%s6 + $0x10] sm:$0xff] %vm259, %v201
  %263 = vst.msk [vmem:[%s6 + $0x18] sm:$0xff] %vm259, %v204
  %264 = vst.msk [vmem:[%s6 + $0x20] sm:$0xff] %vm259, %v207
  %265 = vst.msk [vmem:[%s6 + $0x28] sm:$0xff] %vm259, %v210
  %266 = vst.msk [vmem:[%s6 + $0x30] sm:$0xff] %vm259, %v213
  %267 = vst.msk [vmem:[%s6 + $0x38] sm:$0xff] %vm259, %v216
  %268 = vst.msk [vmem:[%s6 + $0x40] sm:$0xff] %vm259, %v219
  %269 = vst.msk [vmem:[%s6 + $0x48] sm:$0xff] %vm259, %v222
  %270 = vst.msk [vmem:[%s6 + $0x50] sm:$0xff] %vm259, %v225
  %271 = vst.msk [vmem:[%s6 + $0x58] sm:$0xff] %vm259, %v228
  %272 = vst.msk [vmem:[%s6 + $0x60] sm:$0xff] %vm259, %v231
  %273 = vst.msk [vmem:[%s6 + $0x68] sm:$0xff] %vm259, %v234
  %274 = vst.msk [vmem:[%s6 + $0x70] sm:$0xff] %vm259, %v237
  %275 = vst.msk [vmem:[%s6 + $0x78] sm:$0xff] %vm259, %v240
  // Predicated region
  $region22: #{tpu_custom_call.1} parent=0 // pred_check
    _
  $region23: #{tpu_custom_call.1} parent=0 // pred_check_branch
    %277 = sbr.rel (0) target = $region25
  $region24: #{tpu_custom_call.1} parent=0 // pred_region
    _
  $region25: #{tpu_custom_call.1} parent=0 // pred_fallthru
    _
  // Predicated region
  $region26: #{tpu_custom_call.1} parent=0 // pred_check
    _
  $region27: #{tpu_custom_call.1} parent=0 // pred_check_branch
    %279 = sbr.rel (0) target = $region29
  $region28: #{tpu_custom_call.1} parent=0 // pred_region
    _
  $region29: #{tpu_custom_call.1} parent=0 // pred_fallthru
    _
  // Predicated region
  $region30: #{tpu_custom_call.1} parent=0 // pred_check
    _
  $region31: #{tpu_custom_call.1} parent=0 // pred_check_branch
    %281 = sbr.rel (0) target = $region33
  $region32: #{tpu_custom_call.1} parent=0 // pred_region
    _
  $region33: #{tpu_custom_call.1} parent=0 // pred_fallthru
    _
  // Predicated region
  $region34: #{tpu_custom_call.1} parent=0 // pred_check
    _
  $region35: #{tpu_custom_call.1} parent=0 // pred_check_branch
    %283 = sbr.rel (0) target = $region37
  $region36: #{tpu_custom_call.1} parent=0 // pred_region
    _
  $region37: #{tpu_custom_call.1} parent=0 // pred_fallthru
    _

</llo_original>
